<compile_context>
chip_gen: v7x
topology: tpu7x:2x2x1
jax: 0.10.0
libtpu: 0.0.40
codegen_flags: <defaults>
</compile_context>

<pallas_src>
import functools

import jax
import jax.numpy as jnp
import numpy as np
from jax import lax
from jax.experimental import pallas as pl
from jax.experimental.pallas import tpu as pltpu

# ~2 MiB of f32 working set per input block: big enough to amortize the
# ~0.35 us per-grid-step overhead, small enough (with double buffering and a
# handful of f32 temporaries) to fit every generation's VMEM.
_TILE_BUDGET_BYTES = 2 * 1024 * 1024
# Raise the scoped-VMEM limit explicitly (v5e default is only 16 MiB); 48 MiB
# leaves headroom below v7x's 64 MiB physical VMEM.
_VMEM_LIMIT_BYTES = 48 * 1024 * 1024
# 2-D logits with C <= this are routed through the transposed (channels-on-
# sublanes) path; above it, lane padding waste is small enough to stay in the
# rows-on-sublanes layout and avoid the extra transpose pass.
_SMALL_C_MAX = 32


def _focal_term(pt, gamma):
    """(1 - pt) ** gamma with an integer-gamma fast path (no exp/log pair)."""
    g = float(gamma)
    if g == 0.0:
        return 1.0
    one_minus = jnp.maximum(1.0 - pt, 0.0)  # clamp: exp rounding can give pt>1
    if g.is_integer() and 0.0 < g <= 8.0:
        out = one_minus
        for _ in range(int(g) - 1):
            out = out * one_minus
        return out
    return jnp.power(one_minus, jnp.float32(g))


# ---------------------------------------------------------------------------
# Kernel 1: classes on sublanes, spatial/rows on lanes.  Input (B, C, HW).
# ---------------------------------------------------------------------------
def _focal_loss_csub_kernel(x_ref, y_ref, a_ref, out_ref, *,
                            gamma, reduction, hw, ignore_index, has_alpha):
    s = pl.program_id(1)

    x = x_ref[...].astype(jnp.float32)           # (C, T)  classes x spatial
    y = y_ref[...]                               # (1, T)  int32 labels
    c, t = x.shape

    # log_softmax over the class (sublane) axis; log_p is never materialised:
    # log_p[y] = z[y] - lse.
    m = jnp.max(x, axis=0, keepdims=True)        # (1, T)
    z = x - m
    lse = jnp.log(jnp.sum(jnp.exp(z), axis=0, keepdims=True))

    # Fused one-hot gathers along the class axis.
    cls = lax.broadcasted_iota(jnp.int32, (c, t), 0)
    onehot = cls == y                            # (C, T)
    zsel = jnp.sum(jnp.where(onehot, z, 0.0), axis=0, keepdims=True)
    log_pt = zsel - lse                          # (1, T)

    if has_alpha:
        a = a_ref[...].astype(jnp.float32)       # (C, 1) class weights
        a_y = jnp.sum(jnp.where(onehot, a, 0.0), axis=0, keepdims=True)
        ce = -a_y * log_pt
    else:
        ce = -log_pt

    # Mask the ragged spatial tail (no wrapper-side padding) + ignore_index.
    pos = s * t + lax.broadcasted_iota(jnp.int32, (1, t), 1)
    valid = (pos < hw) & (y != ignore_index)

    pt = jnp.exp(log_pt)
    loss = jnp.where(valid, _focal_term(pt, gamma) * ce, 0.0)  # (1, T) lane-dense

    if reduction == "none":
        out_ref[...] = loss
    else:
        # Lane-dense per-batch partial accumulator, resident across the s axis.
        @pl.when(s == 0)
        def _():
            out_ref[...] = jnp.zeros_like(out_ref)
        out_ref[...] += loss


def _pick_lane_tile(c, itemsize, full):
    bytes_per_col = c * max(itemsize, 4)          # size by the f32 working set
    t = _TILE_BUDGET_BYTES // max(1, bytes_per_col)
    t = max(128, min(t, 16384))
    t = (t // 128) * 128
    return full if full <= t else t


def _focal_loss_csub(x3, y3, a2, has_alpha, gamma, reduction, ignore_index):
    """x3: (B, C, HW) logits, y3: (B, 1, HW) int32 labels, a2: (C, 1) weights."""
    b, c, hw = x3.shape
    t = _pick_lane_tile(c, jnp.dtype(x3.dtype).itemsize, hw)
    grid = (b, pl.cdiv(hw, t))

    in_specs = [
        pl.BlockSpec((None, c, t), lambda bi, si: (bi, 0, si)),   # logits
        pl.BlockSpec((None, 1, t), lambda bi, si: (bi, 0, si)),   # labels
        pl.BlockSpec((c, 1), lambda bi, si: (0, 0)),              # alpha
    ]
    kernel = functools.partial(
        _focal_loss_csub_kernel, gamma=float(gamma), reduction=reduction,
        hw=hw, ignore_index=int(ignore_index), has_alpha=has_alpha)

    if reduction == "none":
        out = pl.pallas_call(
            kernel,
            out_shape=jax.ShapeDtypeStruct((b, 1, hw), jnp.float32),
            grid_spec=pltpu.PrefetchScalarGridSpec(
                num_scalar_prefetch=0, grid=grid, in_specs=in_specs,
                out_specs=pl.BlockSpec((None, 1, t), lambda bi, si: (bi, 0, si))),
            compiler_params=pltpu.CompilerParams(
                dimension_semantics=("parallel", "parallel"),
                vmem_limit_bytes=_VMEM_LIMIT_BYTES),
        )(x3, y3, a2)
        return out                                   # (B, 1, HW)

    # TODO(synk): on v7x the b==1 'sum'/'mean' case leaves the second
    # TensorCore idle; a split of the spatial axis into an extra parallel
    # grid dim would help there.
    partials = pl.pallas_call(
        kernel,
        out_shape=jax.ShapeDtypeStruct((b, 1, t), jnp.float32),
        grid_spec=pltpu.PrefetchScalarGridSpec(
            num_scalar_prefetch=0, grid=grid, in_specs=in_specs,
            out_specs=pl.BlockSpec((None, 1, t), lambda bi, si: (bi, 0, 0))),
        compiler_params=pltpu.CompilerParams(
            dimension_semantics=("parallel", "arbitrary"),
            vmem_limit_bytes=_VMEM_LIMIT_BYTES),
    )(x3, y3, a2)
    return jnp.sum(partials)                         # scalar


# ---------------------------------------------------------------------------
# Kernel 2: plain (N, C) inputs with larger C — rows on sublanes, classes on
# lanes.
# ---------------------------------------------------------------------------
def _focal_loss_rows_kernel(x_ref, y_ref, a_ref, out_ref, *,
                            gamma, reduction, n_rows, ignore_index, has_alpha):
    i = pl.program_id(0)

    x = x_ref[...].astype(jnp.float32)           # (TM, C)
    y = y_ref[...]                               # (TM, 1) int32
    tm, c = x.shape

    m = jnp.max(x, axis=-1, keepdims=True)
    z = x - m
    lse = jnp.log(jnp.sum(jnp.exp(z), axis=-1, keepdims=True))

    col = lax.broadcasted_iota(jnp.int32, (tm, c), 1)
    onehot = col == y
    zsel = jnp.sum(jnp.where(onehot, z, 0.0), axis=-1, keepdims=True)
    log_pt = zsel - lse                          # (TM, 1)

    if has_alpha:
        a = a_ref[...].astype(jnp.float32)       # (1, C)
        a_y = jnp.sum(jnp.where(onehot, a, 0.0), axis=-1, keepdims=True)
        ce = -a_y * log_pt
    else:
        ce = -log_pt

    row = i * tm + lax.broadcasted_iota(jnp.int32, (tm, 1), 0)
    valid = (row < n_rows) & (y != ignore_index)

    pt = jnp.exp(log_pt)
    loss = jnp.where(valid, _focal_term(pt, gamma) * ce, 0.0)  # (TM, 1)

    if reduction == "none":
        # Output is 1 lane wide (masked stores), but this kernel only runs for
        # C > _SMALL_C_MAX so the N-float output is negligible vs the N*C read.
        out_ref[...] = loss
    else:
        @pl.when(i == 0)
        def _():
            out_ref[...] = jnp.zeros_like(out_ref)
        out_ref[...] += jnp.sum(loss)


def _pick_row_tile(c, itemsize, n):
    bytes_per_row = c * max(itemsize, 4)          # size by the f32 working set
    tm = _TILE_BUDGET_BYTES // max(1, bytes_per_row)
    tm = max(8, min(tm, 8192))
    tm = (tm // 8) * 8
    return n if n <= tm else tm


def _focal_loss_rows(x, y2, a2, has_alpha, gamma, reduction, ignore_index):
    n, c = x.shape
    tm = _pick_row_tile(c, jnp.dtype(x.dtype).itemsize, n)
    grid = (pl.cdiv(n, tm),)

    in_specs = [
        pl.BlockSpec((tm, c), lambda i: (i, 0)),
        pl.BlockSpec((tm, 1), lambda i: (i, 0)),
        pl.BlockSpec((1, c), lambda i: (0, 0)),
    ]
    kernel = functools.partial(
        _focal_loss_rows_kernel, gamma=float(gamma), reduction=reduction,
        n_rows=n, ignore_index=int(ignore_index), has_alpha=has_alpha)

    if reduction == "none":
        out_shape = jax.ShapeDtypeStruct((n, 1), jnp.float32)
        out_specs = pl.BlockSpec((tm, 1), lambda i: (i, 0))
        dims = ("parallel",)
    else:
        out_shape = jax.ShapeDtypeStruct((1, 1), jnp.float32)
        out_specs = pl.BlockSpec((1, 1), lambda i: (0, 0))
        dims = ("arbitrary",)

    out = pl.pallas_call(
        kernel, out_shape=out_shape,
        grid_spec=pltpu.PrefetchScalarGridSpec(
            num_scalar_prefetch=0, grid=grid,
            in_specs=in_specs, out_specs=out_specs),
        compiler_params=pltpu.CompilerParams(
            dimension_semantics=dims, vmem_limit_bytes=_VMEM_LIMIT_BYTES),
    )(x, y2, a2)

    if reduction == "none":
        return out[:, 0]
    return out[0, 0]


# ---------------------------------------------------------------------------
# Public entry point.
# ---------------------------------------------------------------------------
def focal_loss(x, y, alpha=None, gamma=0.0, reduction="mean", ignore_index=-100):
    """Focal loss matching mlpf FocalLoss.forward.

    x: (B, C) or (B, C, d1, ..., dK) float logits (any float dtype).
    y: (B,)   or (B, d1, ..., dK)    int class labels.
    """
    if reduction not in ("mean", "sum", "none"):
        raise ValueError('Reduction must be one of: "mean", "sum", "none".')

    has_alpha = alpha is not None

    if x.ndim > 2:
        # NCHW / NCd1..dK branch: the module's permute+flatten is folded into
        # the BlockSpec via a metadata-only reshape (no HBM pass).
        b, c = x.shape[0], x.shape[1]
        hw = int(np.prod(x.shape[2:]))
        x3 = x.reshape(b, c, hw)
        y3 = y.reshape(b, 1, hw).astype(jnp.int32)
        n_total = b * hw
    elif x.shape[-1] <= _SMALL_C_MAX:
        # Small-C (N, C): one XLA transpose pass buys a fully lane-dense kernel.
        n, c = x.shape
        x3 = jnp.transpose(x).reshape(1, c, n)
        y3 = y.reshape(1, 1, n).astype(jnp.int32)
        n_total = n
    else:
        # Larger-C (N, C): keep the natural rows-on-sublanes layout.
        n, c = x.shape
        a2 = (jnp.asarray(alpha, jnp.float32) if has_alpha
              else jnp.ones((c,), jnp.float32)).reshape(1, c)
        res = _focal_loss_rows(x, y.reshape(n, 1).astype(jnp.int32), a2,
                               has_alpha, gamma, reduction, ignore_index)
        if reduction == "mean":
            return res / jnp.float32(n)
        return res

    a2 = (jnp.asarray(alpha, jnp.float32) if has_alpha
          else jnp.ones((c,), jnp.float32)).reshape(c, 1)
    res = _focal_loss_csub(x3, y3, a2, has_alpha, gamma, reduction, ignore_index)
    if reduction == "none":
        return res.reshape(-1)
    if reduction == "mean":
        # Matches the module: loss.mean() divides by the total element count.
        return res / jnp.float32(n_total)
    return res


# ---------------------------------------------------------------------------
# Pure-JAX reference mirroring the PyTorch forward (for verification).
# ---------------------------------------------------------------------------
def _focal_loss_ref(x, y, alpha, gamma, reduction):
    if x.ndim > 2:
        c = x.shape[1]
        perm = (0,) + tuple(range(2, x.ndim)) + (1,)
        x = jnp.transpose(x, perm).reshape(-1, c)
        y = y.reshape(-1)
    x = x.astype(jnp.float32)
    log_p = jax.nn.log_softmax(x, axis=-1)
    log_pt = jnp.take_along_axis(log_p, y[:, None].astype(jnp.int32), axis=1)[:, 0]
    a_y = 1.0 if alpha is None else jnp.asarray(alpha, jnp.float32)[y]
    ce = -a_y * log_pt
    pt = jnp.exp(log_pt)
    loss = (1.0 - pt) ** gamma * ce
    if reduction == "mean":
        return loss.mean()
    if reduction == "sum":
        return loss.sum()
    return loss


if __name__ == "__main__":
    key = jax.random.PRNGKey(0)
    k1, k2, k3, k4, k5, k6 = jax.random.split(key, 6)

    # 1) NCHW segmentation-style case (module's ndim > 2 branch).
    B, C, H, W = 2, 8, 16, 16
    x = jax.random.normal(k1, (B, C, H, W), jnp.float32)
    y = jax.random.randint(k2, (B, H, W), 0, C, jnp.int32)
    alpha = jnp.linspace(0.5, 1.5, C, dtype=jnp.float32)

    out_mean = jax.block_until_ready(
        focal_loss(x, y, alpha=alpha, gamma=2.0, reduction="mean"))
    ref_mean = _focal_loss_ref(x, y, alpha, 2.0, "mean")
    np.testing.assert_allclose(np.asarray(out_mean), np.asarray(ref_mean),
                               rtol=1e-4, atol=1e-5)

    out_none = jax.block_until_ready(
        focal_loss(x, y, alpha=alpha, gamma=2.0, reduction="none"))
    ref_none = _focal_loss_ref(x, y, alpha, 2.0, "none")
    np.testing.assert_allclose(np.asarray(out_none), np.asarray(ref_none),
                               rtol=1e-4, atol=1e-5)

    # 2) Plain (N, C) classification, small C (transposed lane-dense path),
    #    non-integer gamma, no alpha.
    N2, C2 = 40, 8
    x2 = jax.random.normal(k3, (N2, C2), jnp.float32)
    y2 = jax.random.randint(k4, (N2,), 0, C2, jnp.int32)
    out_sum = jax.block_until_ready(
        focal_loss(x2, y2, alpha=None, gamma=1.5, reduction="sum"))
    ref_sum = _focal_loss_ref(x2, y2, None, 1.5, "sum")
    np.testing.assert_allclose(np.asarray(out_sum), np.asarray(ref_sum),
                               rtol=1e-4, atol=1e-4)

    alpha2 = jnp.linspace(0.8, 1.2, C2, dtype=jnp.float32)
    out2_none = jax.block_until_ready(
        focal_loss(x2, y2, alpha=alpha2, gamma=2.0, reduction="none"))
    ref2_none = _focal_loss_ref(x2, y2, alpha2, 2.0, "none")
    np.testing.assert_allclose(np.asarray(out2_none), np.asarray(ref2_none),
                               rtol=1e-4, atol=1e-5)

    # 3) Plain (N, C) with larger C (rows-on-sublanes path).
    N3, C3 = 72, 160
    x3 = jax.random.normal(k5, (N3, C3), jnp.float32)
    y3 = jax.random.randint(k6, (N3,), 0, C3, jnp.int32)
    alpha3 = jnp.linspace(0.5, 1.5, C3, dtype=jnp.float32)

    out3_mean = jax.block_until_ready(
        focal_loss(x3, y3, alpha=alpha3, gamma=2.0, reduction="mean"))
    ref3_mean = _focal_loss_ref(x3, y3, alpha3, 2.0, "mean")
    np.testing.assert_allclose(np.asarray(out3_mean), np.asarray(ref3_mean),
                               rtol=1e-4, atol=1e-5)

    out3_none = jax.block_until_ready(
        focal_loss(x3, y3, alpha=alpha3, gamma=2.0, reduction="none"))
    ref3_none = _focal_loss_ref(x3, y3, alpha3, 2.0, "none")
    np.testing.assert_allclose(np.asarray(out3_none), np.asarray(ref3_none),
                               rtol=1e-4, atol=1e-5)

    print("KERNEL_OK")
</pallas_src>

<mosaic_0001>
module attributes {stable_mosaic.version = 11 : i64} {
  func.func @_focal_loss_csub_kernel(%arg0: i32, %arg1: i32, %arg2: memref<1x8x256xf32, #tpu.memory_space<vmem>>, %arg3: memref<1x1x256xi32, #tpu.memory_space<vmem>>, %arg4: memref<8x1xf32, #tpu.memory_space<vmem>>, %arg5: memref<1x1x256xf32, #tpu.memory_space<vmem>>) attributes {dimension_semantics = [#tpu.dimension_semantics<parallel>, #tpu.dimension_semantics<arbitrary>], iteration_bounds = array<i64: 2, 1>, scalar_prefetch = 0 : i64, scratch_operands = 0 : i64, tpu.core_type = #tpu.core_type<tc>, window_params = [{transform_indices = @transform_0, window_bounds = array<i64: 1, 8, 256>}, {transform_indices = @transform_1, window_bounds = array<i64: 1, 1, 256>}, {pipeline_mode = #tpu.pipeline_mode<synchronous>, transform_indices = @transform_2, window_bounds = array<i64: 8, 1>}, {transform_indices = @transform_3, window_bounds = array<i64: 1, 1, 256>}]} {
    %c0 = arith.constant 0 : index
    %c0_0 = arith.constant 0 : index
    %c0_1 = arith.constant 0 : index
    %0 = vector.load %arg2[%c0, %c0_0, %c0_1] : memref<1x8x256xf32, #tpu.memory_space<vmem>>, vector<1x8x256xf32>
    %1 = vector.shape_cast %0 : vector<1x8x256xf32> to vector<8x256xf32>
    %c0_2 = arith.constant 0 : index
    %c0_3 = arith.constant 0 : index
    %c0_4 = arith.constant 0 : index
    %2 = vector.load %arg3[%c0_2, %c0_3, %c0_4] : memref<1x1x256xi32, #tpu.memory_space<vmem>>, vector<1x1x256xi32>
    %3 = vector.shape_cast %2 : vector<1x1x256xi32> to vector<1x256xi32>
    %cst = arith.constant dense<0xFF800000> : vector<256xf32>
    %4 = vector.multi_reduction <maximumf>, %1, %cst [0] : vector<8x256xf32> to vector<256xf32>
    %5 = vector.shape_cast %4 : vector<256xf32> to vector<1x256xf32>
    %6 = vector.broadcast %5 : vector<1x256xf32> to vector<8x256xf32>
    %7 = arith.subf %1, %6 : vector<8x256xf32>
    %8 = math.exp %7 : vector<8x256xf32>
    %cst_5 = arith.constant dense<0.000000e+00> : vector<256xf32>
    %9 = vector.multi_reduction <add>, %8, %cst_5 [0] : vector<8x256xf32> to vector<256xf32>
    %10 = vector.shape_cast %9 : vector<256xf32> to vector<1x256xf32>
    %11 = math.log %10 : vector<1x256xf32>
    %12 = tpu.iota {dimensions = array<i32: 0>} : vector<8x256xi32>
    %13 = vector.broadcast %3 : vector<1x256xi32> to vector<8x256xi32>
    %14 = arith.cmpi eq, %12, %13 : vector<8x256xi32>
    %cst_6 = arith.constant 0.000000e+00 : f32
    %15 = vector.broadcast %cst_6 : f32 to vector<8x256xf32>
    %16 = arith.select %14, %7, %15 : vector<8x256xi1>, vector<8x256xf32>
    %cst_7 = arith.constant dense<0.000000e+00> : vector<256xf32>
    %17 = vector.multi_reduction <add>, %16, %cst_7 [0] : vector<8x256xf32> to vector<256xf32>
    %18 = vector.shape_cast %17 : vector<256xf32> to vector<1x256xf32>
    %19 = arith.subf %18, %11 : vector<1x256xf32>
    %c0_8 = arith.constant 0 : index
    %c0_9 = arith.constant 0 : index
    %20 = vector.load %arg4[%c0_8, %c0_9] : memref<8x1xf32, #tpu.memory_space<vmem>>, vector<8x1xf32>
    %cst_10 = arith.constant 0.000000e+00 : f32
    %21 = vector.shape_cast %20 : vector<8x1xf32> to vector<8x1xf32>
    %22 = vector.broadcast %21 : vector<8x1xf32> to vector<8x256xf32>
    %23 = vector.broadcast %cst_10 : f32 to vector<8x256xf32>
    %24 = arith.select %14, %22, %23 : vector<8x256xi1>, vector<8x256xf32>
    %cst_11 = arith.constant dense<0.000000e+00> : vector<256xf32>
    %25 = vector.multi_reduction <add>, %24, %cst_11 [0] : vector<8x256xf32> to vector<256xf32>
    %26 = vector.shape_cast %25 : vector<256xf32> to vector<1x256xf32>
    %cst_12 = arith.constant 0.000000e+00 : f32
    %27 = vector.broadcast %cst_12 : f32 to vector<1x256xf32>
    %28 = arith.subf %27, %26 : vector<1x256xf32>
    %29 = arith.mulf %28, %19 : vector<1x256xf32>
    %c256_i32 = arith.constant 256 : i32
    %30 = arith.muli %arg1, %c256_i32 : i32
    %31 = tpu.iota {dimensions = array<i32: 1>} : vector<1x256xi32>
    %32 = vector.broadcast %30 : i32 to vector<1x256xi32>
    %33 = arith.addi %32, %31 : vector<1x256xi32>
    %c256_i32_13 = arith.constant 256 : i32
    %34 = vector.broadcast %c256_i32_13 : i32 to vector<1x256xi32>
    %35 = arith.cmpi slt, %33, %34 : vector<1x256xi32>
    %c-100_i32 = arith.constant -100 : i32
    %36 = vector.broadcast %c-100_i32 : i32 to vector<1x256xi32>
    %37 = arith.cmpi ne, %3, %36 : vector<1x256xi32>
    %38 = arith.andi %35, %37 : vector<1x256xi1>
    %39 = math.exp %19 : vector<1x256xf32>
    %cst_14 = arith.constant 1.000000e+00 : f32
    %40 = vector.broadcast %cst_14 : f32 to vector<1x256xf32>
    %41 = arith.subf %40, %39 : vector<1x256xf32>
    %cst_15 = arith.constant 0.000000e+00 : f32
    %42 = vector.broadcast %cst_15 : f32 to vector<1x256xf32>
    %43 = arith.maximumf %41, %42 : vector<1x256xf32>
    %44 = arith.mulf %43, %43 : vector<1x256xf32>
    %45 = arith.mulf %44, %29 : vector<1x256xf32>
    %cst_16 = arith.constant 0.000000e+00 : f32
    %46 = vector.broadcast %cst_16 : f32 to vector<1x256xf32>
    %47 = arith.select %38, %45, %46 : vector<1x256xi1>, vector<1x256xf32>
    %c0_i32 = arith.constant 0 : i32
    %48 = arith.cmpi eq, %arg1, %c0_i32 : i32
    %49 = arith.extui %48 : i1 to i32
    %c0_i32_17 = arith.constant 0 : i32
    %50 = arith.cmpi ne, %49, %c0_i32_17 : i32
    scf.if %50 {
      %cst_24 = arith.constant 0.000000e+00 : f32
      %57 = vector.broadcast %cst_24 : f32 to vector<1x256xf32>
      %c0_25 = arith.constant 0 : index
      %c0_26 = arith.constant 0 : index
      %c0_27 = arith.constant 0 : index
      %58 = vector.load %arg5[%c0_25, %c0_26, %c0_27] : memref<1x1x256xf32, #tpu.memory_space<vmem>>, vector<1x1x256xf32>
      %59 = vector.shape_cast %58 : vector<1x1x256xf32> to vector<1x256xf32>
      %60 = vector.shape_cast %57 : vector<1x256xf32> to vector<1x1x256xf32>
      tpu.vector_store %arg5[%c0_25, %c0_26, %c0_27], %60 {strides = array<i32>} : memref<1x1x256xf32, #tpu.memory_space<vmem>>, vector<1x1x256xf32>,
    } else {
    }
    %c0_18 = arith.constant 0 : index
    %c0_19 = arith.constant 0 : index
    %c0_20 = arith.constant 0 : index
    %51 = vector.load %arg5[%c0_18, %c0_19, %c0_20] : memref<1x1x256xf32, #tpu.memory_space<vmem>>, vector<1x1x256xf32>
    %52 = vector.shape_cast %51 : vector<1x1x256xf32> to vector<1x256xf32>
    %53 = arith.addf %52, %47 : vector<1x256xf32>
    %c0_21 = arith.constant 0 : index
    %c0_22 = arith.constant 0 : index
    %c0_23 = arith.constant 0 : index
    %54 = vector.load %arg5[%c0_21, %c0_22, %c0_23] : memref<1x1x256xf32, #tpu.memory_space<vmem>>, vector<1x1x256xf32>
    %55 = vector.shape_cast %54 : vector<1x1x256xf32> to vector<1x256xf32>
    %56 = vector.shape_cast %53 : vector<1x256xf32> to vector<1x1x256xf32>
    tpu.vector_store %arg5[%c0_21, %c0_22, %c0_23], %56 {strides = array<i32>} : memref<1x1x256xf32, #tpu.memory_space<vmem>>, vector<1x1x256xf32>,
    return
  }
  func.func @transform_0(%arg0: i32, %arg1: i32) -> (i32, i32, i32) {
    %c0_i32 = arith.constant 0 : i32
    %c0_i32_0 = arith.constant 0 : i32
    return %arg0, %c0_i32, %arg1 : i32, i32, i32
  }
  func.func @transform_1(%arg0: i32, %arg1: i32) -> (i32, i32, i32) {
    %c0_i32 = arith.constant 0 : i32
    %c0_i32_0 = arith.constant 0 : i32
    return %arg0, %c0_i32, %arg1 : i32, i32, i32
  }
  func.func @transform_2(%arg0: i32, %arg1: i32) -> (i32, i32) {
    %c0_i32 = arith.constant 0 : i32
    %c0_i32_0 = arith.constant 0 : i32
    %c0_i32_1 = arith.constant 0 : i32
    return %c0_i32, %c0_i32_0 : i32, i32
  }
  func.func @transform_3(%arg0: i32, %arg1: i32) -> (i32, i32, i32) {
    %c0_i32 = arith.constant 0 : i32
    %c0_i32_0 = arith.constant 0 : i32
    %c0_i32_1 = arith.constant 0 : i32
    return %arg0, %c0_i32, %c0_i32_0 : i32, i32, i32
  }
}

</mosaic_0001>

<llo_original>
// kernel: tpu_custom_call.1
$region0: #{tpu_custom_call.1}
  #allocation0 [shape = 'u32[]', space=smem, size = 0x4, offset = 0x4, fixed_abs, tag = 'smem constant byte address 0x4 - core index']
  #allocation1 [shape = 'u32[144,128]{1,0:T(1,128)}', space=vmem, size = 0x12000, scoped, tag = 'internal scratch']
  %s0 = inlined_call_operand.hbm [shape: f32[2,8,256], index: 0, kind: input, shape index: {}]
  %s1 = inlined_call_operand.vmem [shape: s32[2,1,256], index: 1, kind: input, shape index: {}]
  %s2 = inlined_call_operand.vmem [shape: f32[8,1], index: 2, kind: input, shape index: {}]
  %s3 = inlined_call_operand.hbm [shape: f32[2,1,256], index: 3, kind: output, shape index: {}]
  %s4 = sld [smem:[#allocation0]]
  $region53: #{tpu_custom_call.1} parent=0
    _
  %s6 = ssub.s32 1, %s4
  %s7 = scalar_select 0, %s6, %s4
  $region1: #{tpu_custom_call.1} parent=0
    #allocation2 [shape = 'u8[16384]{0}', space=vmem, size = 0x4000, scoped, tag = 'input window, operand 0']
    #allocation3 [shape = 's32[2]{0}', space=sflag, size = 0x8, scoped, tag = 'scoped memory for tpu_custom_call.1']
    #allocation4 [shape = 's32[2]{0}', space=sflag, size = 0x8, scoped, tag = 'scoped memory for tpu_custom_call.1']
    #allocation5 [shape = 'u8[2048]{0}', space=vmem, size = 0x800, scoped, tag = 'output window, operand 0']
    %8 = vsyncpa [#allocation3], 0
    %s9 = scalar_lea.sflag [#allocation3], 1
    %10 = vsyncpa %s9, 0
    %11 = vsyncpa [#allocation4], 0
    %s12 = scalar_lea.sflag [#allocation4], 1
    %13 = vsyncpa %s12, 0
    loop: start=0, step=1, limit=4
    $region2: #{tpu_custom_call.1} parent=1 // loop_pre_header
      _
    $region3: #{tpu_custom_call.1} parent=1 // loop_header
      %s15 = sphi 0, %s19
      %p16 = scmp.ge.s32.totalorder %s15, 4
      %s22 = sphi 0, %s34
      %s23 = sphi 0, %s30
      %s24 = sphi 0, %s22
      %s25 = sphi 0, %s23
      %s26 = sphi 0, %s24
      %s27 = sphi 0, %s25
      %s39 = sphi 0, %s41
      %s42 = sphi 0, %s39
      %s43 = sphi 0, %s42
      %s59 = sphi 0, %s43
      %s67 = sphi 0, %s69
      %s70 = sphi 0, %s67
      %s71 = sphi 0, %s70
      %s87 = sphi 0, %s71
      %s91 = sphi 0, %s91
      %s93 = sphi 0, %s91
      %s94 = sphi 0, %s93
      %s108 = sphi 0, %s94
      %s114 = sphi 0, %s116
      %s117 = sphi 0, %s114
      %s118 = sphi 0, %s117
      %s134 = sphi 0, %s118
    $region4: #{tpu_custom_call.1} parent=1 // loop_header_branch
      %18 = sbr.rel (%p16) target = $region8
    $region5: #{tpu_custom_call.1} parent=1 // loop_body
      %s20 = ssub.s32 %s15, 1
      %s21 = ssub.s32 %s15, 2
      %s28 = sadd.s32 1, %s23
      %p29 = scmp.ge.s32.totalorder %s28, 1
      %s30 = scalar_select %p29, 0, %s28
      %s31 = sadd.s32 1, %s22
      %s32 = scalar_select %p29, %s31, %s22
      %p33 = scmp.ge.s32.totalorder %s32, 2
      %s34 = scalar_select %p33, 0, %s32
      %s35 = ssub.s32 %s22, %s34
      %s36 = ssub.s32 %s23, %s30
      %s37 = sor.u32 %s35, %s36
      %p38 = scmp.eq.s32.totalorder %s37, 0
      %s40 = sadd.s32 %s39, 1
      %s41 = scalar_select %p38, %s39, %s40
      %p44 = pneg %p38
      %p45 = scmp.eq.s32.totalorder %s15, 1
      %p46 = por %p44, %p45
      %p47 = scmp.ne.s32.totalorder %s39, %s42
      %p48 = scmp.eq.s32.totalorder %s15, 0
      %p49 = por %p47, %p48
      %p50 = scmp.ne.s32.totalorder %s39, %s42
      %p51 = scmp.eq.s32.totalorder %s20, 1
      %p52 = por %p50, %p51
      %p53 = scmp.ne.s32.totalorder %s42, %s43
      %p54 = scmp.eq.s32.totalorder %s20, 0
      %p55 = por %p53, %p54
      %p56 = scmp.ne.s32.totalorder %s42, %s43
      %p57 = scmp.eq.s32.totalorder %s21, 1
      %p58 = por %p56, %p57
      %p60 = scmp.ne.s32.totalorder %s43, %s59
      %p61 = scmp.eq.s32.totalorder %s21, 0
      %p62 = por %p60, %p61
      %s63 = ssub.s32 %s22, %s34
      %s64 = ssub.s32 %s23, %s30
      %s65 = sor.u32 %s63, %s64
      %p66 = scmp.eq.s32.totalorder %s65, 0
      %s68 = sadd.s32 %s67, 1
      %s69 = scalar_select %p66, %s67, %s68
      %p72 = pneg %p66
      %p73 = scmp.eq.s32.totalorder %s15, 1
      %p74 = por %p72, %p73
      %p75 = scmp.ne.s32.totalorder %s67, %s70
      %p76 = scmp.eq.s32.totalorder %s15, 0
      %p77 = por %p75, %p76
      %p78 = scmp.ne.s32.totalorder %s67, %s70
      %p79 = scmp.eq.s32.totalorder %s20, 1
      %p80 = por %p78, %p79
      %p81 = scmp.ne.s32.totalorder %s70, %s71
      %p82 = scmp.eq.s32.totalorder %s20, 0
      %p83 = por %p81, %p82
      %p84 = scmp.ne.s32.totalorder %s70, %s71
      %p85 = scmp.eq.s32.totalorder %s21, 1
      %p86 = por %p84, %p85
      %p88 = scmp.ne.s32.totalorder %s71, %s87
      %p89 = scmp.eq.s32.totalorder %s21, 0
      %p90 = por %p88, %p89
      %s92 = sadd.s32 %s91, 1
      %p95 = scmp.eq.s32.totalorder %s15, 1
      %p96 = scmp.ne.s32.totalorder %s91, %s93
      %p97 = scmp.eq.s32.totalorder %s15, 0
      %p98 = por %p96, %p97
      %p99 = scmp.ne.s32.totalorder %s91, %s93
      %p100 = scmp.eq.s32.totalorder %s20, 1
      %p101 = por %p99, %p100
      %p102 = scmp.ne.s32.totalorder %s93, %s94
      %p103 = scmp.eq.s32.totalorder %s20, 0
      %p104 = por %p102, %p103
      %p105 = scmp.ne.s32.totalorder %s93, %s94
      %p106 = scmp.eq.s32.totalorder %s21, 1
      %p107 = por %p105, %p106
      %p109 = scmp.ne.s32.totalorder %s94, %s108
      %p110 = scmp.eq.s32.totalorder %s21, 0
      %p111 = por %p109, %p110
      %s112 = ssub.s32 %s22, %s34
      %p113 = scmp.eq.s32.totalorder %s112, 0
      %s115 = sadd.s32 %s114, 1
      %s116 = scalar_select %p113, %s114, %s115
      %p119 = pneg %p113
      %p120 = scmp.eq.s32.totalorder %s15, 1
      %p121 = por %p119, %p120
      %p122 = scmp.ne.s32.totalorder %s114, %s117
      %p123 = scmp.eq.s32.totalorder %s15, 0
      %p124 = por %p122, %p123
      %p125 = scmp.ne.s32.totalorder %s114, %s117
      %p126 = scmp.eq.s32.totalorder %s20, 1
      %p127 = por %p125, %p126
      %p128 = scmp.ne.s32.totalorder %s117, %s118
      %p129 = scmp.eq.s32.totalorder %s20, 0
      %p130 = por %p128, %p129
      %p131 = scmp.ne.s32.totalorder %s117, %s118
      %p132 = scmp.eq.s32.totalorder %s21, 1
      %p133 = por %p131, %p132
      %p135 = scmp.ne.s32.totalorder %s118, %s134
      %p136 = scmp.eq.s32.totalorder %s21, 0
      %p137 = por %p135, %p136
      %p138 = scmp.le.s32.totalorder 1, %s15
      %p139 = scmp.lt.s32.totalorder %s15, 3
      %p140 = pnand %p138, %p139
      %p141 = pneg %p140
      // Predicated region
      $region9: #{tpu_custom_call.1} parent=5 // pred_check
        _
      $region10: #{tpu_custom_call.1} parent=5 // pred_check_branch
        %143 = sbr.rel (%p140) target = $region12
      $region11: #{tpu_custom_call.1} parent=5 // pred_region
        %s144 = ssub.s32 %s15, 1
        // Predicated region
        $region13: #{tpu_custom_call.1} parent=11 // pred_check
          %p145 = pneg %p104
        $region14: #{tpu_custom_call.1} parent=11 // pred_check_branch
          %147 = sbr.rel (%p145) target = $region16
        $region15: #{tpu_custom_call.1} parent=11 // pred_region
          _
        $region16: #{tpu_custom_call.1} parent=11 // pred_fallthru
          _
      $region12: #{tpu_custom_call.1} parent=5 // pred_fallthru
        _
      %p148 = scmp.lt.s32.totalorder %s15, 2
      // Predicated region
      $region17: #{tpu_custom_call.1} parent=5 // pred_check
        %p149 = pneg %p148
      $region18: #{tpu_custom_call.1} parent=5 // pred_check_branch
        %151 = sbr.rel (%p149) target = $region20
      $region19: #{tpu_custom_call.1} parent=5 // pred_region
        // Predicated region
        $region21: #{tpu_custom_call.1} parent=19 // pred_check
          %p152 = pneg %p49
        $region22: #{tpu_custom_call.1} parent=19 // pred_check_branch
          %154 = sbr.rel (%p152) target = $region24
        $region23: #{tpu_custom_call.1} parent=19 // pred_region
          %s155 = sand.u32 %s39, 1
          %s156 = scalar_lea.sflag [#allocation3], %s155
          %s157 = sand.u32 %s39, 1
          %s158 = smul.addr %s157, 16
          %s159 = scalar_lea.vmem [#allocation2], %s158
          %s160 = smul.u32 2, %s23
          %s162 = ssub.s32 256, 256
          %163 = vsyncadd %s156, %s162
          %s164 = smul.addr %s22, 2
          %s165 = sadd.s32 %s160, %s164
          %s166 = smul.addr %s165, 128
          %s167 = scalar_lea.hbm %s0, %s166
          %s169 = sshll.u32 %s159, 4
          %s170 = int_to_ptr.vmem [resolvable:$true] %s169
          %172 = dma.hbm_to_vmem [thread:$0]  %s167, 256, %s170, %s156
        $region24: #{tpu_custom_call.1} parent=19 // pred_fallthru
          _
        // Predicated region
        $region25: #{tpu_custom_call.1} parent=19 // pred_check
          %p173 = pneg %p77
        $region26: #{tpu_custom_call.1} parent=19 // pred_check_branch
          %175 = sbr.rel (%p173) target = $region28
        $region27: #{tpu_custom_call.1} parent=19 // pred_region
          %s176 = smul.u32 2, %s23
          %p177 = scmp.lt.s32.totalorder %s22, 1
          %s178 = scalar_select %p177, %s22, 1
          %p179 = scmp.lt.s32.totalorder %s176, 1
          %s180 = scalar_select %p179, %s176, 1
          %s181 = smul.addr %s178, 2
          %s182 = sadd.s32 %s180, %s181
          %s183 = scalar_lea.vmem %s1, %s182
          %s184 = smul.u32 2, %s23
        $region28: #{tpu_custom_call.1} parent=19 // pred_fallthru
          _
      $region20: #{tpu_custom_call.1} parent=5 // pred_fallthru
        _
      %p185 = scmp.le.s32.totalorder 1, %s15
      %p186 = scmp.lt.s32.totalorder %s15, 3
      %p187 = pnand %p185, %p186
      %p188 = pneg %p187
      // Predicated region
      $region29: #{tpu_custom_call.1} parent=5 // pred_check
        _
      $region30: #{tpu_custom_call.1} parent=5 // pred_check_branch
        %190 = sbr.rel (%p187) target = $region32
      $region31: #{tpu_custom_call.1} parent=5 // pred_region
        %s191 = ssub.s32 %s15, 1
        %s192 = sand.u32 %s42, 1
        %s193 = scalar_lea.sflag [#allocation3], %s192
        %s194 = sand.u32 %s42, 1
        %s195 = smul.addr %s194, 16
        %s196 = scalar_lea.vmem [#allocation2], %s195
        // Predicated region
        $region33: #{tpu_custom_call.1} parent=31 // pred_check
          %p197 = pneg %p55
        $region34: #{tpu_custom_call.1} parent=31 // pred_check_branch
          %199 = sbr.rel (%p197) target = $region36
        $region35: #{tpu_custom_call.1} parent=31 // pred_region
          %200 = dma.done %s193, 256
        $region36: #{tpu_custom_call.1} parent=31 // pred_fallthru
          _
        %s201 = sand.u32 %s42, 1
        %s202 = scalar_lea.sflag [#allocation3], %s201
        %s203 = sand.u32 %s42, 1
        %s204 = smul.addr %s203, 16
        %s205 = scalar_lea.vmem [#allocation2], %s204
        %p206 = pneg %p55
        %p207 = pneg %p52
        %s208 = smul.u32 2, %s25
        %p209 = scmp.lt.s32.totalorder %s24, 1
        %s210 = scalar_select %p209, %s24, 1
        %p211 = scmp.lt.s32.totalorder %s208, 1
        %s212 = scalar_select %p211, %s208, 1
        %s213 = smul.addr %s210, 2
        %s214 = sadd.s32 %s212, %s213
        %s215 = scalar_lea.vmem %s1, %s214
        %p216 = pneg %p83
        %p217 = pneg %p80
        %p218 = pneg %p104
        %p219 = pneg %p101
        %p220 = pneg %p130
        %p221 = pneg %p127
        %s222 = sand.u32 %s117, 1
        %s223 = scalar_lea.sflag [#allocation4], %s222
        %s224 = sand.u32 %s117, 1
        %s225 = smul.addr %s224, 2
        %s226 = scalar_lea.vmem [#allocation5], %s225
        %s227 = smul.u32 2, %s25
        %s228 = smul.u32 2, %s25
        %p229 = scmp.lt.s32.totalorder %s24, 1
        %s230 = scalar_select %p229, %s24, 1
        %p231 = scmp.lt.s32.totalorder %s228, 1
        %s232 = scalar_select %p231, %s228, 1
        %s233 = smul.addr %s230, 2
        %s234 = sadd.s32 %s232, %s233
        %s235 = scalar_lea.vmem %s1, %s234
        %s236 = smul.u32 2, %s25
        %v237 = vld [vmem:[%s196] sm:$0xff]
        %v238 = vld [vmem:[%s196 + $0x8] sm:$0xff]
        %v239 = vld [vmem:[%s235] sm:$0x3]
        %v240 = vrot.slane %v237, 4
        %v241 = vmax.f32 %v237, %v240
        %v242 = vrot.slane %v241, 2
        %v243 = vmax.f32 %v241, %v242
        %v244 = vrot.slane %v243, 1
        %v245 = vmax.f32 %v243, %v244
        %v246 = vrot.slane %v238, 4
        %v247 = vmax.f32 %v238, %v246
        %v248 = vrot.slane %v247, 2
        %v249 = vmax.f32 %v247, %v248
        %v250 = vrot.slane %v249, 1
        %v251 = vmax.f32 %v249, %v250
        %v252 = vsub.f32 %v237, %v245
        %v253 = vsub.f32 %v238, %v251
        %v254 = vmul.f32 %v252, 1.442695
        %v255 = vpow.pop %v254
        %v256 = vmul.f32 %v253, 1.442695
        %v257 = vpow.pop %v256
        %v258 = vrot.slane %v255, 4
        %v259 = vadd.f32 %v255, %v258
        %v260 = vrot.slane %v259, 2
        %v261 = vadd.f32 %v259, %v260
        %v262 = vrot.slane %v261, 1
        %v263 = vadd.f32 %v261, %v262
        %v264 = vrot.slane %v257, 4
        %v265 = vadd.f32 %v257, %v264
        %v266 = vrot.slane %v265, 2
        %v267 = vadd.f32 %v265, %v266
        %v268 = vrot.slane %v267, 1
        %v269 = vadd.f32 %v267, %v268
        %v270 = vlog2.pop %v263
        %v271 = vmul.f32 %v270, 0.6931472
        %v272 = vlog2.pop %v269
        %v273 = vmul.f32 %v272, 0.6931472
        %v274 = vlaneseq
        %v275 = vshrl.u32 %v274, 7
        %v276 = vlaneseq
        %v277 = vshrl.u32 %v276, 7
        %v278 = vsub.s32 0, %v277
        %v279 = vrot.slane %v239, %v278
        %v280 = vlaneseq
        %v281 = vshrl.u32 %v280, 7
        %v282 = vsub.s32 1, %v281
        %v283 = vrot.slane %v239, %v282
        %vm284 = vcmp.eq.s32.totalorder %v275, %v279
        %vm285 = vcmp.eq.s32.totalorder %v275, %v283
        %v286 = vsel %vm284, %v252, 0.0
        %v287 = vsel %vm285, %v253, 0.0
        %v288 = vrot.slane %v286, 4
        %v289 = vadd.f32 %v286, %v288
        %v290 = vrot.slane %v289, 2
        %v291 = vadd.f32 %v289, %v290
        %v292 = vrot.slane %v291, 1
        %v293 = vadd.f32 %v291, %v292
        %v294 = vrot.slane %v287, 4
        %v295 = vadd.f32 %v287, %v294
        %v296 = vrot.slane %v295, 2
        %v297 = vadd.f32 %v295, %v296
        %v298 = vrot.slane %v297, 1
        %v299 = vadd.f32 %v297, %v298
        %v300 = vsub.f32 %v293, %v271
        %v301 = vsub.f32 %v299, %v273
        %v302 = vld [vmem:[%s2] sm:$0xff]
        %304 = vset.pattern.permute.xlu0 0
        %305 = vperm.xlu0 %304, %v302
        %v306 = vpop.permute.xlu0 %305
        %v308 = vsel %vm284, %v306, 0.0
        %v309 = vsel %vm285, %v306, 0.0
        %v310 = vrot.slane %v308, 4
        %v311 = vadd.f32 %v308, %v310
        %v312 = vrot.slane %v311, 2
        %v313 = vadd.f32 %v311, %v312
        %v314 = vrot.slane %v313, 1
        %v315 = vadd.f32 %v313, %v314
        %v316 = vrot.slane %v309, 4
        %v317 = vadd.f32 %v309, %v316
        %v318 = vrot.slane %v317, 2
        %v319 = vadd.f32 %v317, %v318
        %v320 = vrot.slane %v319, 1
        %v321 = vadd.f32 %v319, %v320
        %v322 = vsub.f32 0.0, %v315
        %v323 = vsub.f32 0.0, %v321
        %v324 = vmul.f32 %v322, %v300
        %v325 = vmul.f32 %v323, %v301
        %s326 = smul.u32 %s25, 256
        %v327 = vlaneseq
        %v328 = vand.u32 %v327, 127
        %v329 = vadd.s32 %v328, 128
        %v330 = vstv %s326
        %v331 = vadd.s32 %v330, %v328
        %v332 = vadd.s32 %v330, %v329
        %vm333 = vcmp.lt.s32.totalorder %v331, 256
        %vm334 = vcmp.lt.s32.totalorder %v332, 256
        %vm335 = vcmp.ne.s32.totalorder %v239, 4294967196
        %v336 = vsel %vm335, 1, 0
        %v337 = vlaneseq
        %v338 = vshrl.u32 %v337, 7
        %v339 = vsub.s32 0, %v338
        %v340 = vrot.slane %v336, %v339
        %v341 = vlaneseq
        %v342 = vshrl.u32 %v341, 7
        %v343 = vsub.s32 1, %v342
        %v344 = vrot.slane %v336, %v343
        %vm345 = vcmp.ne.s32.totalorder %v340, 0
        %vm346 = vcmp.ne.s32.totalorder %v344, 0
        %vm347 = vmand %vm333, %vm345
        %vm348 = vmand %vm334, %vm346
        %v349 = vmul.f32 %v300, 1.442695
        %v350 = vpow.pop %v349
        %v351 = vmul.f32 %v301, 1.442695
        %v352 = vpow.pop %v351
        %v353 = vsub.f32 1.0, %v350
        %v354 = vsub.f32 1.0, %v352
        %v355 = vmax.f32 %v353, 0.0
        %v356 = vmax.f32 %v354, 0.0
        %v357 = vmul.f32 %v355, %v355
        %v358 = vmul.f32 %v356, %v356
        %v359 = vmul.f32 %v357, %v324
        %v360 = vmul.f32 %v358, %v325
        %v361 = vsel %vm347, %v359, 0.0
        %v362 = vsel %vm348, %v360, 0.0
        %p363 = scmp.eq.s32.totalorder %s25, 0
        // Predicated region
        $region37: #{tpu_custom_call.1} parent=31 // pred_check
          %p364 = pneg %p363
        $region38: #{tpu_custom_call.1} parent=31 // pred_check_branch
          %366 = sbr.rel (%p364) target = $region40
        $region39: #{tpu_custom_call.1} parent=31 // pred_region
          %v367 = vlaneseq
          %vm368 = vcmp.ge.s32.totalorder %v367, 0
          %vm369 = vcmp.lt.s32.totalorder %v367, 256
          %vm370 = vmand %vm368, %vm369
          %371 = vst.msk [vmem:[%s226] sm:$0x3] %vm370, 0.0
        $region40: #{tpu_custom_call.1} parent=31 // pred_fallthru
          _
        %v372 = vld [vmem:[%s226] sm:$0x3]
        %v375 = vcombine.low %v361, %v362
        %v377 = vunpack.c.l.s4 1966171168
        %v378 = vunpack.c.0.s8 %v377
        %v379 = vlaneseq
        %v380 = vshrl.u32 %v379, 7
        %v381 = vsub.s32 %v378, %v380
        %v382 = vrot.slane %v375, %v381
        %v384 = vunpack.c.l.s4 1966171168
        %v385 = vunpack.c.0.s8 %v384
        %v386 = vlaneseq
        %v387 = vshrl.u32 %v386, 7
        %v388 = vsub.s32 %v385, %v387
        %v389 = vrot.slane %v382, %v388
        %v391 = vadd.f32 %v372, %v389
        %v392 = vlaneseq
        %vm393 = vcmp.ge.s32.totalorder %v392, 0
        %vm394 = vcmp.lt.s32.totalorder %v392, 256
        %vm395 = vmand %vm393, %vm394
        %396 = vst.msk [vmem:[%s226] sm:$0x3] %vm395, %v391
        %s397 = sand.u32 %s117, 1
        %s398 = scalar_lea.sflag [#allocation4], %s397
        %s399 = sand.u32 %s117, 1
        %s400 = smul.addr %s399, 2
        %s401 = scalar_lea.vmem [#allocation5], %s400
        // Predicated region
        $region41: #{tpu_custom_call.1} parent=31 // pred_check
          %p402 = pneg %p127
        $region42: #{tpu_custom_call.1} parent=31 // pred_check_branch
          %404 = sbr.rel (%p402) target = $region44
        $region43: #{tpu_custom_call.1} parent=31 // pred_region
          %s406 = ssub.s32 32, 32
          %407 = vsyncadd %s398, %s406
          %s408 = smul.addr %s24, 2
          %s409 = smul.addr %s408, 16
          %s410 = scalar_lea.hbm %s3, %s409
          %s412 = sshll.u32 %s401, 4
          %s413 = int_to_ptr.vmem [resolvable:$true] %s412
          %415 = dma.vmem_to_hbm [thread:$0]  %s413, 32, %s410, %s398
        $region44: #{tpu_custom_call.1} parent=31 // pred_fallthru
          _
      $region32: #{tpu_custom_call.1} parent=5 // pred_fallthru
        _
      %p416 = scmp.le.s32.totalorder 2, %s15
      // Predicated region
      $region45: #{tpu_custom_call.1} parent=5 // pred_check
        %p417 = pneg %p416
      $region46: #{tpu_custom_call.1} parent=5 // pred_check_branch
        %419 = sbr.rel (%p417) target = $region48
      $region47: #{tpu_custom_call.1} parent=5 // pred_region
        %s420 = ssub.s32 %s15, 2
        // Predicated region
        $region49: #{tpu_custom_call.1} parent=47 // pred_check
          %p421 = pneg %p133
        $region50: #{tpu_custom_call.1} parent=47 // pred_check_branch
          %423 = sbr.rel (%p421) target = $region52
        $region51: #{tpu_custom_call.1} parent=47 // pred_region
          %s424 = sand.u32 %s118, 1
          %s425 = scalar_lea.sflag [#allocation4], %s424
          %s426 = sand.u32 %s118, 1
          %s427 = smul.addr %s426, 2
          %s428 = scalar_lea.vmem [#allocation5], %s427
          %429 = dma.done %s425, 32
        $region52: #{tpu_custom_call.1} parent=47 // pred_fallthru
          _
      $region48: #{tpu_custom_call.1} parent=5 // pred_fallthru
        _
    $region6: #{tpu_custom_call.1} parent=1 // loop_footer
      %s19 = sadd.s32 1, %s15
    $region7: #{tpu_custom_call.1} parent=1 // loop_footer_branch
      %14 = sbr.rel target = $region3
    $region8: #{tpu_custom_call.1} parent=1 // loop_exit
      _
    %430 = vsyncpa [#allocation3], 1
    %s431 = scalar_lea.sflag [#allocation3], 1
    %432 = vsyncpa %s431, 1
    %433 = vsyncpa [#allocation4], 1
    %s434 = scalar_lea.sflag [#allocation4], 1
    %435 = vsyncpa %s434, 1

</llo_original>
